<compile_context>
chip_gen: v7x
topology: tpu7x:2x2x1
jax: 0.10.0
libtpu: 0.0.40
codegen_flags: <defaults>
</compile_context>

<pallas_src>
import functools

import jax
import jax.numpy as jnp
from jax.experimental import pallas as pl
from jax.experimental.pallas import tpu as pltpu

# Deterministic "parameters" from the module's __init__ (alpha=0.25, gamma=2).
ALPHA = 0.25
GAMMA = 2.0

_LANES = 128
_SUBLANES = 8
_TARGET_STEP_BYTES = 2 * 1024 * 1024     # combined input bytes per grid step
_MAX_TILE_ROWS = 4096
_VMEM_LIMIT_BYTES = 32 * 1024 * 1024


def _round_up(x, m):
    return (x + m - 1) // m * m


def _round_down(x, m):
    return (x // m) * m


def _sublane_align(dtype):
    # Minimum sublane multiple for a given element width: 8 (32-bit),
    # 16 (16-bit), 32 (8-bit).
    bits = jnp.dtype(dtype).itemsize * 8
    return max(_SUBLANES, 256 // bits)


def _num_tensorcores():
    """Best-effort TensorCore count (2 on v7x, 1 on v5e/v6e).

    Defaults to 2: an oversized leading "parallel" axis is just one extra
    serial grid step on 1-TC chips, while undersizing it on v7x loses ~2x.
    """
    try:
        info = pltpu.get_tpu_info()
    except Exception:
        return 2
    for attr in ("num_tensorcores", "tensorcore_count", "num_cores", "core_count"):
        v = getattr(info, attr, None)
        if isinstance(v, int) and v > 0:
            return max(1, min(2, v))
    return 2


def _focal_loss_kernel(x_ref, t_ref, out_ref, *, alpha0, alpha1, gamma,
                       full_rows, rem, tile_rows, inner_blocks, needs_mask):
    c = pl.program_id(0)   # "parallel" core axis
    i = pl.program_id(1)   # "arbitrary" reduction axis

    @pl.when(i == 0)
    def _():
        out_ref[...] = jnp.zeros_like(out_ref)

    x = x_ref[...].astype(jnp.float32)
    t = t_ref[...].astype(jnp.float32)

    # Numerically stable BCE-with-logits (matches F.binary_cross_entropy_with_logits):
    #   max(x, 0) - x*t + log1p(exp(-|x|))
    e = jnp.exp(-jnp.abs(x))                      # shared transcendental
    bce = jnp.maximum(x, 0.0) - x * t + jnp.log1p(e)

    # pt = exp(-BCE). For binary targets this is sigmoid(x) when t==1 and
    # 1 - sigmoid(x) when t==0, so reuse e instead of a second exp().
    inv = 1.0 / (1.0 + e)                         # sigmoid(|x|)
    p = jnp.where(x >= 0.0, inv, e * inv)         # sigmoid(x)

    pos = t > 0.5                                 # shared predicate for pt and at
    pt = jnp.where(pos, p, 1.0 - p)

    # at = alpha_table.gather(0, targets.long()) -> per-element select.
    # NOTE: exact match with PyTorch only for binary {0,1} targets (the
    # reference's .long() truncation makes soft labels pick alpha_table[0]).
    at = jnp.where(pos, jnp.float32(alpha1), jnp.float32(alpha0))

    one_m_pt = 1.0 - pt
    g = float(gamma)
    if g == 2.0:
        mod = one_m_pt * one_m_pt                 # avoid pow -> exp(g*log(.))
    elif g == 1.0:
        mod = one_m_pt
    elif g == 0.0:
        mod = jnp.ones_like(one_m_pt)
    else:
        mod = one_m_pt ** jnp.float32(g)

    f = at * mod * bce

    def _accumulate(vals):
        # Reduce (tile_rows, 128) -> (8, 128) along the leading (tile) axis:
        # pure VPU adds into a full-vreg accumulator, no cross-sublane XLU
        # reduce and no masked 1-sublane stores.
        out_ref[...] += vals.reshape(tile_rows // _SUBLANES, _SUBLANES, _LANES).sum(axis=0)

    if needs_mask:
        # Only blocks whose coverage extends past the last fully-valid row pay
        # for the mask; interior blocks take the cheap path.
        block_idx = c * inner_blocks + i
        block_end_row = (block_idx + 1) * tile_rows
        is_boundary = block_end_row > full_rows

        @pl.when(is_boundary)
        def _():
            base_row = block_idx * tile_rows
            row = base_row + jax.lax.broadcasted_iota(jnp.int32, f.shape, 0)
            valid = row < full_rows
            if rem:
                col = jax.lax.broadcasted_iota(jnp.int32, f.shape, 1)
                valid = valid | ((row == full_rows) & (col < rem))
            _accumulate(jnp.where(valid, f, 0.0))

        @pl.when(jnp.logical_not(is_boundary))
        def _():
            _accumulate(f)
    else:
        _accumulate(f)


def focal_loss_pallas(inputs, targets, *, alpha=ALPHA, gamma=GAMMA):
    """Mean focal loss over (flattened) logits/targets via a Pallas TPU kernel.

    NOTE: matches the PyTorch module exactly for binary {0, 1} targets; for
    soft / non-binary targets the alpha selection (`t > 0.5`) diverges from the
    reference's `.long()` truncation.
    """
    assert inputs.shape == targets.shape
    x = inputs.reshape(-1)
    t = targets.reshape(-1)
    n = x.shape[0]

    rows = pl.cdiv(n, _LANES)
    # Minimal (<1 row) pad only when N is not lane-aligned; everything else is
    # handled by out-of-bounds block reads plus the in-kernel boundary mask,
    # so no full-array copy is made for lane-aligned ragged sizes.
    if rows * _LANES != n:
        x = jnp.pad(x, (0, rows * _LANES - n))
        t = jnp.pad(t, (0, rows * _LANES - n))

    # No dtype upcast here: the kernel casts on load, so narrow source dtypes
    # (bf16 logits, int8/bf16 targets) stream at their native width.
    x2d = x.reshape(rows, _LANES)
    t2d = t.reshape(rows, _LANES)

    align = max(_sublane_align(x2d.dtype), _sublane_align(t2d.dtype))

    num_cores = _num_tensorcores()
    if rows < num_cores * align:
        # Too small to split across cores; also guarantees every block's start
        # row lies inside the array (only the tail block overhangs).
        num_cores = 1

    # Size each grid step to move ~_TARGET_STEP_BYTES of input so the fixed
    # per-step overhead is amortized; narrower dtypes get proportionally more
    # rows per step.
    bytes_per_row = _LANES * (x2d.dtype.itemsize + t2d.dtype.itemsize)
    cap = max(align, _round_down(min(_MAX_TILE_ROWS,
                                     _TARGET_STEP_BYTES // bytes_per_row), align))
    tile_rows = min(cap, _round_up(pl.cdiv(rows, num_cores), align))
    inner_blocks = pl.cdiv(rows, num_cores * tile_rows)
    rows_cov = num_cores * inner_blocks * tile_rows

    full_rows = n // _LANES              # number of fully-valid rows
    rem = n - full_rows * _LANES         # valid lanes in the partial row (0 if aligned)
    needs_mask = rows_cov * _LANES != n

    kernel = functools.partial(
        _focal_loss_kernel,
        alpha0=float(alpha),
        alpha1=float(1.0 - alpha),
        gamma=float(gamma),
        full_rows=full_rows,
        rem=rem,
        tile_rows=tile_rows,
        inner_blocks=inner_blocks,
        needs_mask=needs_mask,
    )

    in_map = lambda c, i: (c * inner_blocks + i, 0)

    partials = pl.pallas_call(
        kernel,
        out_shape=jax.ShapeDtypeStruct((num_cores * _SUBLANES, _LANES), jnp.float32),
        grid_spec=pltpu.PrefetchScalarGridSpec(
            num_scalar_prefetch=0,
            grid=(num_cores, inner_blocks),
            in_specs=[
                pl.BlockSpec((tile_rows, _LANES), in_map),
                pl.BlockSpec((tile_rows, _LANES), in_map),
            ],
            out_specs=pl.BlockSpec((_SUBLANES, _LANES), lambda c, i: (c, 0)),
        ),
        compiler_params=pltpu.CompilerParams(
            dimension_semantics=("parallel", "arbitrary"),
            vmem_limit_bytes=_VMEM_LIMIT_BYTES,
        ),
    )(x2d, t2d)

    return jnp.sum(partials) / jnp.float32(n)


def focal_loss_ref(inputs, targets, *, alpha=ALPHA, gamma=GAMMA):
    """Pure-JAX reference mirroring the PyTorch module."""
    x = inputs.reshape(-1).astype(jnp.float32)
    t = targets.reshape(-1).astype(jnp.float32)
    bce = jnp.maximum(x, 0.0) - x * t + jnp.log1p(jnp.exp(-jnp.abs(x)))
    alpha_tbl = jnp.array([alpha, 1.0 - alpha], dtype=jnp.float32)
    at = alpha_tbl[t.astype(jnp.int32)]
    pt = jnp.exp(-bce)
    return jnp.mean(at * (1.0 - pt) ** gamma * bce)


if __name__ == "__main__":
    key = jax.random.PRNGKey(0)

    ok = True
    # Case 1: nicely aligned 1-D logits / binary targets (no pad, no mask).
    # Case 2: ragged length (exercises the minimal pad + gated boundary mask).
    for case_n in (2048, 2000):
        k1, k2 = jax.random.split(jax.random.fold_in(key, case_n))
        inputs = jax.random.normal(k1, (case_n,), dtype=jnp.float32) * 2.0
        targets = jax.random.bernoulli(k2, p=0.3, shape=(case_n,)).astype(jnp.float32)

        loss = focal_loss_pallas(inputs, targets)
        jax.block_until_ready(loss)

        ref = focal_loss_ref(inputs, targets)
        if not jnp.allclose(loss, ref, rtol=1e-4, atol=1e-6):
            ok = False
            print("MISMATCH", case_n, float(loss), float(ref))

    assert ok
    print("KERNEL_OK")
</pallas_src>

<mosaic_0001>
module attributes {stable_mosaic.version = 11 : i64} {
  func.func @_focal_loss_kernel(%arg0: i32, %arg1: i32, %arg2: memref<8x128xf32, #tpu.memory_space<vmem>>, %arg3: memref<8x128xf32, #tpu.memory_space<vmem>>, %arg4: memref<8x128xf32, #tpu.memory_space<vmem>>) attributes {dimension_semantics = [#tpu.dimension_semantics<parallel>, #tpu.dimension_semantics<arbitrary>], iteration_bounds = array<i64: 2, 1>, scalar_prefetch = 0 : i64, scratch_operands = 0 : i64, tpu.core_type = #tpu.core_type<tc>, window_params = [{transform_indices = @transform_0, window_bounds = array<i64: 8, 128>}, {transform_indices = @transform_1, window_bounds = array<i64: 8, 128>}, {transform_indices = @transform_2, window_bounds = array<i64: 8, 128>}]} {
    %c0_i32 = arith.constant 0 : i32
    %0 = arith.cmpi eq, %arg1, %c0_i32 : i32
    %1 = arith.extui %0 : i1 to i32
    %c0_i32_0 = arith.constant 0 : i32
    %2 = arith.cmpi ne, %1, %c0_i32_0 : i32
    scf.if %2 {
      %cst_18 = arith.constant 0.000000e+00 : f32
      %41 = vector.broadcast %cst_18 : f32 to vector<8x128xf32>
      %c0_19 = arith.constant 0 : index
      %c0_20 = arith.constant 0 : index
      %42 = vector.load %arg4[%c0_19, %c0_20] : memref<8x128xf32, #tpu.memory_space<vmem>>, vector<8x128xf32>
      tpu.vector_store %arg4[%c0_19, %c0_20], %41 {strides = array<i32>} : memref<8x128xf32, #tpu.memory_space<vmem>>, vector<8x128xf32>,
    } else {
    }
    %c0 = arith.constant 0 : index
    %c0_1 = arith.constant 0 : index
    %3 = vector.load %arg2[%c0, %c0_1] : memref<8x128xf32, #tpu.memory_space<vmem>>, vector<8x128xf32>
    %c0_2 = arith.constant 0 : index
    %c0_3 = arith.constant 0 : index
    %4 = vector.load %arg3[%c0_2, %c0_3] : memref<8x128xf32, #tpu.memory_space<vmem>>, vector<8x128xf32>
    %5 = math.absf %3 : vector<8x128xf32>
    %cst = arith.constant 0.000000e+00 : f32
    %6 = vector.broadcast %cst : f32 to vector<8x128xf32>
    %7 = arith.subf %6, %5 : vector<8x128xf32>
    %8 = math.exp %7 : vector<8x128xf32>
    %cst_4 = arith.constant 0.000000e+00 : f32
    %9 = vector.broadcast %cst_4 : f32 to vector<8x128xf32>
    %10 = arith.maximumf %3, %9 : vector<8x128xf32>
    %11 = arith.mulf %3, %4 : vector<8x128xf32>
    %12 = arith.subf %10, %11 : vector<8x128xf32>
    %13 = math.log1p %8 : vector<8x128xf32>
    %14 = arith.addf %12, %13 : vector<8x128xf32>
    %cst_5 = arith.constant 1.000000e+00 : f32
    %15 = vector.broadcast %cst_5 : f32 to vector<8x128xf32>
    %16 = arith.addf %15, %8 : vector<8x128xf32>
    %cst_6 = arith.constant 1.000000e+00 : f32
    %17 = vector.broadcast %cst_6 : f32 to vector<8x128xf32>
    %18 = arith.divf %17, %16 : vector<8x128xf32>
    %cst_7 = arith.constant 0.000000e+00 : f32
    %19 = vector.broadcast %cst_7 : f32 to vector<8x128xf32>
    %20 = arith.cmpf oge, %3, %19 : vector<8x128xf32>
    %21 = arith.mulf %8, %18 : vector<8x128xf32>
    %22 = arith.select %20, %18, %21 : vector<8x128xi1>, vector<8x128xf32>
    %cst_8 = arith.constant 5.000000e-01 : f32
    %23 = vector.broadcast %cst_8 : f32 to vector<8x128xf32>
    %24 = arith.cmpf ogt, %4, %23 : vector<8x128xf32>
    %cst_9 = arith.constant 1.000000e+00 : f32
    %25 = vector.broadcast %cst_9 : f32 to vector<8x128xf32>
    %26 = arith.subf %25, %22 : vector<8x128xf32>
    %27 = arith.select %24, %22, %26 : vector<8x128xi1>, vector<8x128xf32>
    %cst_10 = arith.constant 7.500000e-01 : f32
    %cst_11 = arith.constant 2.500000e-01 : f32
    %28 = vector.broadcast %cst_10 : f32 to vector<8x128xf32>
    %29 = vector.broadcast %cst_11 : f32 to vector<8x128xf32>
    %30 = arith.select %24, %28, %29 : vector<8x128xi1>, vector<8x128xf32>
    %cst_12 = arith.constant 1.000000e+00 : f32
    %31 = vector.broadcast %cst_12 : f32 to vector<8x128xf32>
    %32 = arith.subf %31, %27 : vector<8x128xf32>
    %33 = arith.mulf %32, %32 : vector<8x128xf32>
    %34 = arith.mulf %30, %33 : vector<8x128xf32>
    %35 = arith.mulf %34, %14 : vector<8x128xf32>
    %c0_13 = arith.constant 0 : index
    %c0_14 = arith.constant 0 : index
    %36 = vector.load %arg4[%c0_13, %c0_14] : memref<8x128xf32, #tpu.memory_space<vmem>>, vector<8x128xf32>
    %37 = vector.shape_cast %35 : vector<8x128xf32> to vector<1x8x128xf32>
    %cst_15 = arith.constant dense<0.000000e+00> : vector<8x128xf32>
    %38 = vector.multi_reduction <add>, %37, %cst_15 [0] : vector<1x8x128xf32> to vector<8x128xf32>
    %39 = arith.addf %36, %38 : vector<8x128xf32>
    %c0_16 = arith.constant 0 : index
    %c0_17 = arith.constant 0 : index
    %40 = vector.load %arg4[%c0_16, %c0_17] : memref<8x128xf32, #tpu.memory_space<vmem>>, vector<8x128xf32>
    tpu.vector_store %arg4[%c0_16, %c0_17], %39 {strides = array<i32>} : memref<8x128xf32, #tpu.memory_space<vmem>>, vector<8x128xf32>,
    return
  }
  func.func @transform_0(%arg0: i32, %arg1: i32) -> (i32, i32) {
    %c1_i32 = arith.constant 1 : i32
    %0 = arith.muli %arg0, %c1_i32 : i32
    %1 = arith.addi %0, %arg1 : i32
    %c0_i32 = arith.constant 0 : i32
    %c0_i32_0 = arith.constant 0 : i32
    return %1, %c0_i32 : i32, i32
  }
  func.func @transform_1(%arg0: i32, %arg1: i32) -> (i32, i32) {
    %c1_i32 = arith.constant 1 : i32
    %0 = arith.muli %arg0, %c1_i32 : i32
    %1 = arith.addi %0, %arg1 : i32
    %c0_i32 = arith.constant 0 : i32
    %c0_i32_0 = arith.constant 0 : i32
    return %1, %c0_i32 : i32, i32
  }
  func.func @transform_2(%arg0: i32, %arg1: i32) -> (i32, i32) {
    %c0_i32 = arith.constant 0 : i32
    %c0_i32_0 = arith.constant 0 : i32
    return %arg0, %c0_i32 : i32, i32
  }
}

</mosaic_0001>

<llo_original>
// kernel: tpu_custom_call.1
$region0: #{tpu_custom_call.1}
  #allocation0 [shape = 'u32[]', space=smem, size = 0x4, offset = 0x4, fixed_abs, tag = 'smem constant byte address 0x4 - core index']
  #allocation1 [shape = 'u32[144,128]{1,0:T(1,128)}', space=vmem, size = 0x12000, scoped, tag = 'internal scratch']
  %s0 = inlined_call_operand.hbm [shape: f32[16,128], index: 0, kind: input, shape index: {}]
  %s1 = inlined_call_operand.hbm [shape: f32[16,128], index: 1, kind: input, shape index: {}]
  %s2 = inlined_call_operand.hbm [shape: f32[16,128], index: 2, kind: output, shape index: {}]
  %s3 = sld [smem:[#allocation0]]
  $region53: #{tpu_custom_call.1} parent=0
    _
  %s5 = ssub.s32 1, %s3
  %s6 = scalar_select 0, %s5, %s3
  $region1: #{tpu_custom_call.1} parent=0
    #allocation2 [shape = 'u8[8192]{0}', space=vmem, size = 0x2000, scoped, tag = 'input window, operand 0']
    #allocation3 [shape = 's32[2]{0}', space=sflag, size = 0x8, scoped, tag = 'scoped memory for tpu_custom_call.1']
    #allocation4 [shape = 's32[2]{0}', space=sflag, size = 0x8, scoped, tag = 'scoped memory for tpu_custom_call.1']
    #allocation5 [shape = 'u8[8192]{0}', space=vmem, size = 0x2000, scoped, tag = 'input window, operand 1']
    #allocation6 [shape = 's32[2]{0}', space=sflag, size = 0x8, scoped, tag = 'scoped memory for tpu_custom_call.1']
    #allocation7 [shape = 'u8[8192]{0}', space=vmem, size = 0x2000, scoped, tag = 'output window, operand 0']
    %7 = vsyncpa [#allocation3], 0
    %s8 = scalar_lea.sflag [#allocation3], 1
    %9 = vsyncpa %s8, 0
    %10 = vsyncpa [#allocation6], 0
    %s11 = scalar_lea.sflag [#allocation6], 1
    %12 = vsyncpa %s11, 0
    %13 = vsyncpa [#allocation4], 0
    %s14 = scalar_lea.sflag [#allocation4], 1
    %15 = vsyncpa %s14, 0
    loop: start=0, step=1, limit=4
    $region2: #{tpu_custom_call.1} parent=1 // loop_pre_header
      _
    $region3: #{tpu_custom_call.1} parent=1 // loop_header
      %s17 = sphi 0, %s21
      %p18 = scmp.ge.s32.totalorder %s17, 4
      %s24 = sphi 0, %s36
      %s25 = sphi 0, %s32
      %s26 = sphi 0, %s24
      %s27 = sphi 0, %s25
      %s28 = sphi 0, %s26
      %s29 = sphi 0, %s27
      %s41 = sphi 0, %s43
      %s44 = sphi 0, %s41
      %s45 = sphi 0, %s44
      %s61 = sphi 0, %s45
      %s69 = sphi 0, %s71
      %s72 = sphi 0, %s69
      %s73 = sphi 0, %s72
      %s89 = sphi 0, %s73
      %s95 = sphi 0, %s97
      %s98 = sphi 0, %s95
      %s99 = sphi 0, %s98
      %s115 = sphi 0, %s99
    $region4: #{tpu_custom_call.1} parent=1 // loop_header_branch
      %20 = sbr.rel (%p18) target = $region8
    $region5: #{tpu_custom_call.1} parent=1 // loop_body
      %s22 = ssub.s32 %s17, 1
      %s23 = ssub.s32 %s17, 2
      %s30 = sadd.s32 1, %s25
      %p31 = scmp.ge.s32.totalorder %s30, 1
      %s32 = scalar_select %p31, 0, %s30
      %s33 = sadd.s32 1, %s24
      %s34 = scalar_select %p31, %s33, %s24
      %p35 = scmp.ge.s32.totalorder %s34, 2
      %s36 = scalar_select %p35, 0, %s34
      %s37 = sadd.s32 %s24, %s25
      %s38 = sadd.s32 %s36, %s32
      %s39 = ssub.s32 %s37, %s38
      %p40 = scmp.eq.s32.totalorder %s39, 0
      %s42 = sadd.s32 %s41, 1
      %s43 = scalar_select %p40, %s41, %s42
      %p46 = pneg %p40
      %p47 = scmp.eq.s32.totalorder %s17, 1
      %p48 = por %p46, %p47
      %p49 = scmp.ne.s32.totalorder %s41, %s44
      %p50 = scmp.eq.s32.totalorder %s17, 0
      %p51 = por %p49, %p50
      %p52 = scmp.ne.s32.totalorder %s41, %s44
      %p53 = scmp.eq.s32.totalorder %s22, 1
      %p54 = por %p52, %p53
      %p55 = scmp.ne.s32.totalorder %s44, %s45
      %p56 = scmp.eq.s32.totalorder %s22, 0
      %p57 = por %p55, %p56
      %p58 = scmp.ne.s32.totalorder %s44, %s45
      %p59 = scmp.eq.s32.totalorder %s23, 1
      %p60 = por %p58, %p59
      %p62 = scmp.ne.s32.totalorder %s45, %s61
      %p63 = scmp.eq.s32.totalorder %s23, 0
      %p64 = por %p62, %p63
      %s65 = sadd.s32 %s24, %s25
      %s66 = sadd.s32 %s36, %s32
      %s67 = ssub.s32 %s65, %s66
      %p68 = scmp.eq.s32.totalorder %s67, 0
      %s70 = sadd.s32 %s69, 1
      %s71 = scalar_select %p68, %s69, %s70
      %p74 = pneg %p68
      %p75 = scmp.eq.s32.totalorder %s17, 1
      %p76 = por %p74, %p75
      %p77 = scmp.ne.s32.totalorder %s69, %s72
      %p78 = scmp.eq.s32.totalorder %s17, 0
      %p79 = por %p77, %p78
      %p80 = scmp.ne.s32.totalorder %s69, %s72
      %p81 = scmp.eq.s32.totalorder %s22, 1
      %p82 = por %p80, %p81
      %p83 = scmp.ne.s32.totalorder %s72, %s73
      %p84 = scmp.eq.s32.totalorder %s22, 0
      %p85 = por %p83, %p84
      %p86 = scmp.ne.s32.totalorder %s72, %s73
      %p87 = scmp.eq.s32.totalorder %s23, 1
      %p88 = por %p86, %p87
      %p90 = scmp.ne.s32.totalorder %s73, %s89
      %p91 = scmp.eq.s32.totalorder %s23, 0
      %p92 = por %p90, %p91
      %s93 = ssub.s32 %s24, %s36
      %p94 = scmp.eq.s32.totalorder %s93, 0
      %s96 = sadd.s32 %s95, 1
      %s97 = scalar_select %p94, %s95, %s96
      %p100 = pneg %p94
      %p101 = scmp.eq.s32.totalorder %s17, 1
      %p102 = por %p100, %p101
      %p103 = scmp.ne.s32.totalorder %s95, %s98
      %p104 = scmp.eq.s32.totalorder %s17, 0
      %p105 = por %p103, %p104
      %p106 = scmp.ne.s32.totalorder %s95, %s98
      %p107 = scmp.eq.s32.totalorder %s22, 1
      %p108 = por %p106, %p107
      %p109 = scmp.ne.s32.totalorder %s98, %s99
      %p110 = scmp.eq.s32.totalorder %s22, 0
      %p111 = por %p109, %p110
      %p112 = scmp.ne.s32.totalorder %s98, %s99
      %p113 = scmp.eq.s32.totalorder %s23, 1
      %p114 = por %p112, %p113
      %p116 = scmp.ne.s32.totalorder %s99, %s115
      %p117 = scmp.eq.s32.totalorder %s23, 0
      %p118 = por %p116, %p117
      %p119 = scmp.le.s32.totalorder 1, %s17
      %p120 = scmp.lt.s32.totalorder %s17, 3
      %p121 = pnand %p119, %p120
      %p122 = pneg %p121
      // Predicated region
      $region9: #{tpu_custom_call.1} parent=5 // pred_check
        _
      $region10: #{tpu_custom_call.1} parent=5 // pred_check_branch
        %124 = sbr.rel (%p121) target = $region12
      $region11: #{tpu_custom_call.1} parent=5 // pred_region
        %s125 = ssub.s32 %s17, 1
      $region12: #{tpu_custom_call.1} parent=5 // pred_fallthru
        _
      %p126 = scmp.lt.s32.totalorder %s17, 2
      // Predicated region
      $region13: #{tpu_custom_call.1} parent=5 // pred_check
        %p127 = pneg %p126
      $region14: #{tpu_custom_call.1} parent=5 // pred_check_branch
        %129 = sbr.rel (%p127) target = $region16
      $region15: #{tpu_custom_call.1} parent=5 // pred_region
        // Predicated region
        $region17: #{tpu_custom_call.1} parent=15 // pred_check
          %p130 = pneg %p51
        $region18: #{tpu_custom_call.1} parent=15 // pred_check_branch
          %132 = sbr.rel (%p130) target = $region20
        $region19: #{tpu_custom_call.1} parent=15 // pred_region
          %s133 = sand.u32 %s41, 1
          %s134 = scalar_lea.sflag [#allocation3], %s133
          %s135 = sand.u32 %s41, 1
          %s136 = smul.addr %s135, 8
          %s137 = scalar_lea.vmem [#allocation2], %s136
          %s138 = sadd.s32 %s24, %s25
          %s140 = ssub.s32 128, 128
          %141 = vsyncadd %s134, %s140
          %s142 = smul.addr %s138, 128
          %s143 = scalar_lea.hbm %s0, %s142
          %s145 = sshll.u32 %s137, 4
          %s146 = int_to_ptr.vmem [resolvable:$true] %s145
          %148 = dma.hbm_to_vmem [thread:$0]  %s143, 128, %s146, %s134
        $region20: #{tpu_custom_call.1} parent=15 // pred_fallthru
          _
        // Predicated region
        $region21: #{tpu_custom_call.1} parent=15 // pred_check
          %p149 = pneg %p79
        $region22: #{tpu_custom_call.1} parent=15 // pred_check_branch
          %151 = sbr.rel (%p149) target = $region24
        $region23: #{tpu_custom_call.1} parent=15 // pred_region
          %s152 = sand.u32 %s69, 1
          %s153 = scalar_lea.sflag [#allocation6], %s152
          %s154 = sand.u32 %s69, 1
          %s155 = smul.addr %s154, 8
          %s156 = scalar_lea.vmem [#allocation5], %s155
          %s157 = sadd.s32 %s24, %s25
          %s159 = ssub.s32 128, 128
          %160 = vsyncadd %s153, %s159
          %s161 = smul.addr %s157, 128
          %s162 = scalar_lea.hbm %s1, %s161
          %s164 = sshll.u32 %s156, 4
          %s165 = int_to_ptr.vmem [resolvable:$true] %s164
          %167 = dma.hbm_to_vmem [thread:$0]  %s162, 128, %s165, %s153
        $region24: #{tpu_custom_call.1} parent=15 // pred_fallthru
          _
      $region16: #{tpu_custom_call.1} parent=5 // pred_fallthru
        _
      %p168 = scmp.le.s32.totalorder 1, %s17
      %p169 = scmp.lt.s32.totalorder %s17, 3
      %p170 = pnand %p168, %p169
      %p171 = pneg %p170
      // Predicated region
      $region25: #{tpu_custom_call.1} parent=5 // pred_check
        _
      $region26: #{tpu_custom_call.1} parent=5 // pred_check_branch
        %173 = sbr.rel (%p170) target = $region28
      $region27: #{tpu_custom_call.1} parent=5 // pred_region
        %s174 = ssub.s32 %s17, 1
        %s175 = sand.u32 %s44, 1
        %s176 = scalar_lea.sflag [#allocation3], %s175
        %s177 = sand.u32 %s44, 1
        %s178 = smul.addr %s177, 8
        %s179 = scalar_lea.vmem [#allocation2], %s178
        // Predicated region
        $region29: #{tpu_custom_call.1} parent=27 // pred_check
          %p180 = pneg %p57
        $region30: #{tpu_custom_call.1} parent=27 // pred_check_branch
          %182 = sbr.rel (%p180) target = $region32
        $region31: #{tpu_custom_call.1} parent=27 // pred_region
          %183 = dma.done %s176, 128
        $region32: #{tpu_custom_call.1} parent=27 // pred_fallthru
          _
        %s184 = sand.u32 %s72, 1
        %s185 = scalar_lea.sflag [#allocation6], %s184
        %s186 = sand.u32 %s72, 1
        %s187 = smul.addr %s186, 8
        %s188 = scalar_lea.vmem [#allocation5], %s187
        // Predicated region
        $region33: #{tpu_custom_call.1} parent=27 // pred_check
          %p189 = pneg %p85
        $region34: #{tpu_custom_call.1} parent=27 // pred_check_branch
          %191 = sbr.rel (%p189) target = $region36
        $region35: #{tpu_custom_call.1} parent=27 // pred_region
          %192 = dma.done %s185, 128
        $region36: #{tpu_custom_call.1} parent=27 // pred_fallthru
          _
        %s193 = sand.u32 %s44, 1
        %s194 = scalar_lea.sflag [#allocation3], %s193
        %s195 = sand.u32 %s44, 1
        %s196 = smul.addr %s195, 8
        %s197 = scalar_lea.vmem [#allocation2], %s196
        %p198 = pneg %p57
        %p199 = pneg %p54
        %s200 = sand.u32 %s72, 1
        %s201 = scalar_lea.sflag [#allocation6], %s200
        %s202 = sand.u32 %s72, 1
        %s203 = smul.addr %s202, 8
        %s204 = scalar_lea.vmem [#allocation5], %s203
        %p205 = pneg %p85
        %p206 = pneg %p82
        %p207 = pneg %p111
        %p208 = pneg %p108
        %s209 = sand.u32 %s98, 1
        %s210 = scalar_lea.sflag [#allocation4], %s209
        %s211 = sand.u32 %s98, 1
        %s212 = smul.addr %s211, 8
        %s213 = scalar_lea.vmem [#allocation7], %s212
        %s214 = sadd.s32 %s26, %s27
        %s215 = sadd.s32 %s26, %s27
        %p216 = scmp.eq.s32.totalorder %s27, 0
        // Predicated region
        $region37: #{tpu_custom_call.1} parent=27 // pred_check
          %p217 = pneg %p216
        $region38: #{tpu_custom_call.1} parent=27 // pred_check_branch
          %219 = sbr.rel (%p217) target = $region40
        $region39: #{tpu_custom_call.1} parent=27 // pred_region
          %220 = vst [vmem:[%s213] sm:$0xff] 0.0
        $region40: #{tpu_custom_call.1} parent=27 // pred_fallthru
          _
        %v221 = vld [vmem:[%s179] sm:$0xff]
        %v222 = vld [vmem:[%s188] sm:$0xff]
        %v223 = vand.u32 2147483647, %v221
        %v224 = vsub.f32 0.0, %v223
        %v225 = vmul.f32 %v224, 1.442695
        %v226 = vpow.pop %v225
        %v227 = vmax.f32 %v221, 0.0
        %v228 = vmul.f32 %v221, %v222
        %v229 = vsub.f32 %v227, %v228
        %v230 = vadd.f32 %v226, 1.0
        %v231 = vlog2.pop %v230
        %v232 = vmul.f32 %v231, 0.6931472
        %v233 = vmul.f32 -0.5, %v226
        %v234 = vadd.f32 %v233, 1.0
        %v235 = vmul.f32 %v234, %v226
        %v236 = vand.u32 2147483647, %v226
        %vm237 = vcmp.lt.f32.partialorder %v236, 0.0004427343
        %v238 = vsel %vm237, %v235, %v232
        %v239 = vadd.f32 %v229, %v238
        %v240 = vadd.f32 %v226, 1.0
        %v241 = vrcp.pop %v240
        %v242 = vmul.f32 1.0, %v241
        %vm243 = vcmp.ge.f32.partialorder %v221, 0.0
        %v244 = vmul.f32 %v226, %v242
        %v245 = vsel %vm243, %v242, %v244
        %vm246 = vcmp.gt.f32.partialorder %v222, 0.5
        %v247 = vsub.f32 1.0, %v245
        %v248 = vsel %vm246, %v245, %v247
        %v249 = vsel %vm246, 0.75, 0.25
        %v250 = vsub.f32 1.0, %v248
        %v251 = vmul.f32 %v250, %v250
        %v252 = vmul.f32 %v249, %v251
        %v253 = vmul.f32 %v252, %v239
        %v254 = vld [vmem:[%s213] sm:$0xff]
        %v255 = vadd.f32 %v253, 0.0
        %v256 = vadd.f32 %v254, %v255
        %257 = vst [vmem:[%s213] sm:$0xff] %v256
        %s258 = sand.u32 %s98, 1
        %s259 = scalar_lea.sflag [#allocation4], %s258
        %s260 = sand.u32 %s98, 1
        %s261 = smul.addr %s260, 8
        %s262 = scalar_lea.vmem [#allocation7], %s261
        // Predicated region
        $region41: #{tpu_custom_call.1} parent=27 // pred_check
          %p263 = pneg %p108
        $region42: #{tpu_custom_call.1} parent=27 // pred_check_branch
          %265 = sbr.rel (%p263) target = $region44
        $region43: #{tpu_custom_call.1} parent=27 // pred_region
          %s267 = ssub.s32 128, 128
          %268 = vsyncadd %s259, %s267
          %s269 = smul.addr %s26, 128
          %s270 = scalar_lea.hbm %s2, %s269
          %s272 = sshll.u32 %s262, 4
          %s273 = int_to_ptr.vmem [resolvable:$true] %s272
          %275 = dma.vmem_to_hbm [thread:$0]  %s273, 128, %s270, %s259
        $region44: #{tpu_custom_call.1} parent=27 // pred_fallthru
          _
      $region28: #{tpu_custom_call.1} parent=5 // pred_fallthru
        _
      %p276 = scmp.le.s32.totalorder 2, %s17
      // Predicated region
      $region45: #{tpu_custom_call.1} parent=5 // pred_check
        %p277 = pneg %p276
      $region46: #{tpu_custom_call.1} parent=5 // pred_check_branch
        %279 = sbr.rel (%p277) target = $region48
      $region47: #{tpu_custom_call.1} parent=5 // pred_region
        %s280 = ssub.s32 %s17, 2
        // Predicated region
        $region49: #{tpu_custom_call.1} parent=47 // pred_check
          %p281 = pneg %p114
        $region50: #{tpu_custom_call.1} parent=47 // pred_check_branch
          %283 = sbr.rel (%p281) target = $region52
        $region51: #{tpu_custom_call.1} parent=47 // pred_region
          %s284 = sand.u32 %s99, 1
          %s285 = scalar_lea.sflag [#allocation4], %s284
          %s286 = sand.u32 %s99, 1
          %s287 = smul.addr %s286, 8
          %s288 = scalar_lea.vmem [#allocation7], %s287
          %289 = dma.done %s285, 128
        $region52: #{tpu_custom_call.1} parent=47 // pred_fallthru
          _
      $region48: #{tpu_custom_call.1} parent=5 // pred_fallthru
        _
    $region6: #{tpu_custom_call.1} parent=1 // loop_footer
      %s21 = sadd.s32 1, %s17
    $region7: #{tpu_custom_call.1} parent=1 // loop_footer_branch
      %16 = sbr.rel target = $region3
    $region8: #{tpu_custom_call.1} parent=1 // loop_exit
      _
    %290 = vsyncpa [#allocation3], 1
    %s291 = scalar_lea.sflag [#allocation3], 1
    %292 = vsyncpa %s291, 1
    %293 = vsyncpa [#allocation6], 1
    %s294 = scalar_lea.sflag [#allocation6], 1
    %295 = vsyncpa %s294, 1
    %296 = vsyncpa [#allocation4], 1
    %s297 = scalar_lea.sflag [#allocation4], 1
    %298 = vsyncpa %s297, 1

</llo_original>
